<compile_context>
chip_gen: v7x
topology: tpu7x:2x2x1
jax: 0.10.0
libtpu: 0.0.40
codegen_flags: <defaults>
</compile_context>

<pallas_src>
import functools

import jax
import jax.numpy as jnp
from jax.experimental import pallas as pl
from jax.experimental.pallas import tpu as pltpu

NEG_SLOPE = 0.1                  # nn.LeakyReLU(negative_slope=0.1)
BN_EPS = 1e-5                    # nn.BatchNorm2d default eps
VMEM_LIMIT = 32 * 1024 * 1024    # safe on v5e/v6e/v7x; tiles below are far under this


def _round_up(x, m):
    return (x + m - 1) // m * m


# ---------------- pass 1: conv pre-activations + per-tile BN statistics ----------------
def conv_stats_kernel(p_ref, w_ref, sum_ref, sumsq_ref, act_ref, *, cout):
    """One row tile: conv matmul, emit pre-activations + per-tile channel sum / sum-of-squares.

    p_ref   : (row_tile, K)   bf16 im2col patches tile           (K left unpadded -> [R3])
    w_ref   : (K, Cp)         bf16 weights, resident across grid (Cp = 128-lane padded)
    sum_ref, sumsq_ref : (1, 1, Cp) f32  per-tile partials (distinct block per step) [R6]
    act_ref : (row_tile, cout) f32 dense conv pre-activations                       [R1][R4]
    """
    acc = jnp.dot(p_ref[...], w_ref[...], preferred_element_type=jnp.float32)  # (row_tile, Cp)
    sum_ref[...] = jnp.sum(acc, axis=0, keepdims=True)[None]          # (1, 1, Cp)
    sumsq_ref[...] = jnp.sum(acc * acc, axis=0, keepdims=True)[None]  # (1, 1, Cp)
    # Dense f32 store of the real channels only (keeps precision; no 16x padded slab). [R4]
    act_ref[...] = acc[:, :cout].astype(act_ref.dtype)


# ---------------- pass 2: folded BN + LeakyReLU (pure elementwise) ----------------
def bn_act_kernel(y_ref, scale_ref, bias_ref, o_ref):
    """out = LeakyReLU(preact * scale + bias); scale/bias already fold mean/var/gamma/beta.

    y_ref   : (row_tile, Cout) f32 pre-activations
    scale_ref, bias_ref : (1, Cout) f32
    o_ref   : (row_tile, Cout) f32
    """
    y = y_ref[...] * scale_ref[...] + bias_ref[...]
    o_ref[...] = jnp.maximum(y, NEG_SLOPE * y).astype(o_ref.dtype)


def cnn_block(x, weight, gamma, beta, *, stride=1, padding=1,
              row_tile=1024, mxu_dtype=jnp.bfloat16):
    """x: (N, Cin, H, W) NCHW; weight: (Cout, Cin, Kh, Kw) OIHW (PyTorch conventions)."""
    N, Cin, H, W = x.shape
    Cout, _, Kh, Kw = weight.shape
    Ho = (H + 2 * padding - Kh) // stride + 1
    Wo = (W + 2 * padding - Kw) // stride + 1
    R = N * Ho * Wo
    K = Cin * Kh * Kw

    Cp = _round_up(Cout, 128)          # 128-lane weight / stats width (weight pad is ~KB) [R3]
    num_tiles = pl.cdiv(R, row_tile)
    Rp = num_tiles * row_tile

    # --- im2col (layout plumbing in XLA; inputs cast to bf16 once, up front) ---
    # TODO(synk): in-kernel shifted-window conv to remove this 9x HBM duplication (see header).
    xl = x.astype(mxu_dtype)
    xp = jnp.pad(xl, ((0, 0), (0, 0), (padding, padding), (padding, padding)))
    slices = []
    for kh in range(Kh):
        for kw in range(Kw):
            slices.append(xp[:, :, kh:kh + stride * Ho:stride, kw:kw + stride * Wo:stride])
    # (Kh*Kw, N, Cin, Ho, Wo) -> (N, Ho, Wo, Cin, Kh*Kw) -> (R, K)
    patches = jnp.stack(slices, axis=0).transpose(1, 3, 4, 2, 0).reshape(R, K)
    # Pad rows only (zero rows are inert for stats); K stays unpadded.                   [R3]
    patches = jnp.pad(patches, ((0, Rp - R), (0, 0)))

    # (Cout, Cin, Kh, Kw) -> (K, Cout) -> pad output-channel lanes only to (K, Cp).
    w2d = weight.astype(mxu_dtype).reshape(Cout, K).T
    w2d = jnp.pad(w2d, ((0, 0), (0, Cp - Cout)))

    grid = (num_tiles,)
    patch_spec = pl.BlockSpec((row_tile, K), lambda i: (i, 0))     # last dim == full array dim
    w_spec = pl.BlockSpec((K, Cp), lambda i: (0, 0))               # resident across grid
    stat_spec = pl.BlockSpec((1, 1, Cp), lambda i: (i, 0, 0))      # per-tile partials     [R6]
    act_spec = pl.BlockSpec((row_tile, Cout), lambda i: (i, 0))    # dense Cout-wide       [R4]

    # --- pass 1: conv + per-tile stats; no carried state -> "parallel" (2 TCs on v7x) ---
    sum_p, sumsq_p, preact = pl.pallas_call(
        functools.partial(conv_stats_kernel, cout=Cout),
        out_shape=(jax.ShapeDtypeStruct((num_tiles, 1, Cp), jnp.float32),
                   jax.ShapeDtypeStruct((num_tiles, 1, Cp), jnp.float32),
                   jax.ShapeDtypeStruct((Rp, Cout), jnp.float32)),
        grid=grid,
        in_specs=[patch_spec, w_spec],
        out_specs=(stat_spec, stat_spec, act_spec),
        compiler_params=pltpu.CompilerParams(
            dimension_semantics=("parallel",),
            vmem_limit_bytes=VMEM_LIMIT),
    )(patches, w2d)

    # --- fold BN into a single scale/bias (tiny, plain JAX, f32; tree-reduced partials) ---
    # Zero-padded rows contribute 0 to sum/sumsq, so dividing by the true R is exact.
    sum_c = jnp.sum(sum_p, axis=(0, 1))[:Cout]
    sumsq_c = jnp.sum(sumsq_p, axis=(0, 1))[:Cout]
    mean = sum_c / R
    var = jnp.maximum(sumsq_c / R - mean * mean, 0.0)
    scale = gamma.astype(jnp.float32) * jax.lax.rsqrt(var + BN_EPS)
    bias = beta.astype(jnp.float32) - mean * scale
    scale2 = scale.reshape(1, Cout)
    bias2 = bias.reshape(1, Cout)

    # --- pass 2: pure elementwise normalize + LeakyReLU over the stored pre-activations ---
    vec_spec = pl.BlockSpec((1, Cout), lambda i: (0, 0))
    out2d = pl.pallas_call(
        bn_act_kernel,
        out_shape=jax.ShapeDtypeStruct((Rp, Cout), jnp.float32),
        grid=grid,
        in_specs=[act_spec, vec_spec, vec_spec],
        out_specs=act_spec,
        compiler_params=pltpu.CompilerParams(
            dimension_semantics=("parallel",),
            vmem_limit_bytes=VMEM_LIMIT),
    )(preact, scale2, bias2)

    # Strip row padding, back to NCHW only at the module boundary (PyTorch layout contract).
    out = out2d[:R].reshape(N, Ho, Wo, Cout).transpose(0, 3, 1, 2)
    return out.astype(x.dtype)


def reference_cnn_block(x, weight, gamma, beta, *, conv_dtype=jnp.float32):
    """Pure-JAX reference mirroring PyTorch training-mode semantics.

    conv_dtype lets the reference use the same bf16 conv inputs as the kernel's
    mixed-precision MXU path (accumulation stays f32)."""
    y = jax.lax.conv_general_dilated(
        x.astype(conv_dtype), weight.astype(conv_dtype),
        window_strides=(1, 1), padding=((1, 1), (1, 1)),
        dimension_numbers=("NCHW", "OIHW", "NCHW"),
        preferred_element_type=jnp.float32)
    mean = jnp.mean(y, axis=(0, 2, 3), keepdims=True)
    var = jnp.mean(jnp.square(y - mean), axis=(0, 2, 3), keepdims=True)
    yn = (y - mean) * jax.lax.rsqrt(var + BN_EPS)
    yn = yn * gamma.reshape(1, -1, 1, 1) + beta.reshape(1, -1, 1, 1)
    return jnp.maximum(yn, NEG_SLOPE * yn)


if __name__ == "__main__":
    # CNNBlock(in_channels=4, out_channels=8, use_batchnorm=True,
    #          kernel_size=3, stride=1, padding=1)
    N, Cin, H, W = 2, 4, 16, 16
    Cout, Ksz = 8, 3

    key = jax.random.PRNGKey(0)
    kx, kw, kg, kb = jax.random.split(key, 4)
    x = jax.random.normal(kx, (N, Cin, H, W), dtype=jnp.float32)
    weight = jax.random.normal(kw, (Cout, Cin, Ksz, Ksz), dtype=jnp.float32) * 0.1  # conv weight, no bias
    gamma = 1.0 + 0.1 * jax.random.normal(kg, (Cout,), dtype=jnp.float32)            # bn.weight
    beta = 0.1 * jax.random.normal(kb, (Cout,), dtype=jnp.float32)                   # bn.bias

    # row_tile=128 so the tiny test exercises a multi-step grid (R = 2*16*16 = 512 -> 4 tiles).
    out = cnn_block(x, weight, gamma, beta, stride=1, padding=1, row_tile=128)
    out = jax.block_until_ready(out)
    assert out.shape == (N, Cout, H, W)

    # Apples-to-apples check against a reference using the same bf16 conv inputs.
    ref_bf16 = reference_cnn_block(x, weight, gamma, beta, conv_dtype=jnp.bfloat16)
    assert jnp.allclose(out, ref_bf16, atol=5e-3, rtol=5e-3), "mismatch vs bf16-input reference"

    # Sanity check against the full-f32 module semantics (looser: bf16 MXU quantization).
    ref_f32 = reference_cnn_block(x, weight, gamma, beta)
    assert jnp.allclose(out, ref_f32, atol=5e-2, rtol=5e-2), "mismatch vs f32 reference"

    print("KERNEL_OK")
</pallas_src>

<mosaic_0001>
module attributes {stable_mosaic.version = 11 : i64} {
  func.func @conv_stats_kernel(%arg0: i32, %arg1: memref<128x36xbf16, #tpu.memory_space<vmem>>, %arg2: memref<36x128xbf16, #tpu.memory_space<vmem>>, %arg3: memref<1x1x128xf32, #tpu.memory_space<vmem>>, %arg4: memref<1x1x128xf32, #tpu.memory_space<vmem>>, %arg5: memref<128x8xf32, #tpu.memory_space<vmem>>) attributes {dimension_semantics = [#tpu.dimension_semantics<parallel>], iteration_bounds = array<i64: 4>, scalar_prefetch = 0 : i64, scratch_operands = 0 : i64, tpu.core_type = #tpu.core_type<tc>, window_params = [{transform_indices = @transform_0, window_bounds = array<i64: 128, 36>}, {pipeline_mode = #tpu.pipeline_mode<synchronous>, transform_indices = @transform_1, window_bounds = array<i64: 36, 128>}, {transform_indices = @transform_2, window_bounds = array<i64: 1, 1, 128>}, {transform_indices = @transform_3, window_bounds = array<i64: 1, 1, 128>}, {transform_indices = @transform_4, window_bounds = array<i64: 128, 8>}]} {
    %c0 = arith.constant 0 : index
    %c0_0 = arith.constant 0 : index
    %0 = vector.load %arg1[%c0, %c0_0] : memref<128x36xbf16, #tpu.memory_space<vmem>>, vector<128x36xbf16>
    %c0_1 = arith.constant 0 : index
    %c0_2 = arith.constant 0 : index
    %1 = vector.load %arg2[%c0_1, %c0_2] : memref<36x128xbf16, #tpu.memory_space<vmem>>, vector<36x128xbf16>
    %cst = arith.constant dense<0.000000e+00> : vector<128x128xf32>
    %2 = tpu.matmul %0, %1, %cst {dimension_numbers = #tpu.dot_dimension_numbers<[1], [0], [0], [1], [0, 0, 1, 1], [], []>} : vector<128x36xbf16>, vector<36x128xbf16>, vector<128x128xf32> -> vector<128x128xf32>
    %cst_3 = arith.constant dense<0.000000e+00> : vector<128xf32>
    %3 = vector.multi_reduction <add>, %2, %cst_3 [0] : vector<128x128xf32> to vector<128xf32>
    %4 = vector.shape_cast %3 : vector<128xf32> to vector<1x128xf32>
    %5 = vector.shape_cast %4 : vector<1x128xf32> to vector<1x1x128xf32>
    %c0_4 = arith.constant 0 : index
    %c0_5 = arith.constant 0 : index
    %c0_6 = arith.constant 0 : index
    %6 = vector.load %arg3[%c0_4, %c0_5, %c0_6] : memref<1x1x128xf32, #tpu.memory_space<vmem>>, vector<1x1x128xf32>
    tpu.vector_store %arg3[%c0_4, %c0_5, %c0_6], %5 {strides = array<i32>} : memref<1x1x128xf32, #tpu.memory_space<vmem>>, vector<1x1x128xf32>,
    %7 = arith.mulf %2, %2 : vector<128x128xf32>
    %cst_7 = arith.constant dense<0.000000e+00> : vector<128xf32>
    %8 = vector.multi_reduction <add>, %7, %cst_7 [0] : vector<128x128xf32> to vector<128xf32>
    %9 = vector.shape_cast %8 : vector<128xf32> to vector<1x128xf32>
    %10 = vector.shape_cast %9 : vector<1x128xf32> to vector<1x1x128xf32>
    %c0_8 = arith.constant 0 : index
    %c0_9 = arith.constant 0 : index
    %c0_10 = arith.constant 0 : index
    %11 = vector.load %arg4[%c0_8, %c0_9, %c0_10] : memref<1x1x128xf32, #tpu.memory_space<vmem>>, vector<1x1x128xf32>
    tpu.vector_store %arg4[%c0_8, %c0_9, %c0_10], %10 {strides = array<i32>} : memref<1x1x128xf32, #tpu.memory_space<vmem>>, vector<1x1x128xf32>,
    %12 = vector.extract_strided_slice %2 {offsets = [0, 0], sizes = [128, 8], strides = [1, 1]} : vector<128x128xf32> to vector<128x8xf32>
    %c0_11 = arith.constant 0 : index
    %c0_12 = arith.constant 0 : index
    %13 = vector.load %arg5[%c0_11, %c0_12] : memref<128x8xf32, #tpu.memory_space<vmem>>, vector<128x8xf32>
    tpu.vector_store %arg5[%c0_11, %c0_12], %12 {strides = array<i32>} : memref<128x8xf32, #tpu.memory_space<vmem>>, vector<128x8xf32>,
    return
  }
  func.func @transform_0(%arg0: i32) -> (i32, i32) {
    %c0_i32 = arith.constant 0 : i32
    %c0_i32_0 = arith.constant 0 : i32
    return %arg0, %c0_i32 : i32, i32
  }
  func.func @transform_1(%arg0: i32) -> (i32, i32) {
    %c0_i32 = arith.constant 0 : i32
    %c0_i32_0 = arith.constant 0 : i32
    %c0_i32_1 = arith.constant 0 : i32
    return %c0_i32, %c0_i32_0 : i32, i32
  }
  func.func @transform_2(%arg0: i32) -> (i32, i32, i32) {
    %c0_i32 = arith.constant 0 : i32
    %c0_i32_0 = arith.constant 0 : i32
    %c0_i32_1 = arith.constant 0 : i32
    return %arg0, %c0_i32, %c0_i32_0 : i32, i32, i32
  }
  func.func @transform_3(%arg0: i32) -> (i32, i32, i32) {
    %c0_i32 = arith.constant 0 : i32
    %c0_i32_0 = arith.constant 0 : i32
    %c0_i32_1 = arith.constant 0 : i32
    return %arg0, %c0_i32, %c0_i32_0 : i32, i32, i32
  }
  func.func @transform_4(%arg0: i32) -> (i32, i32) {
    %c0_i32 = arith.constant 0 : i32
    %c0_i32_0 = arith.constant 0 : i32
    return %arg0, %c0_i32 : i32, i32
  }
}

</mosaic_0001>

<llo_original>
// kernel: tpu_custom_call.1
$region0: #{tpu_custom_call.1}
  #allocation0 [shape = 'u32[]', space=smem, size = 0x4, offset = 0x4, fixed_abs, tag = 'smem constant byte address 0x4 - core index']
  #allocation1 [shape = 'u32[144,128]{1,0:T(1,128)}', space=vmem, size = 0x12000, scoped, tag = 'internal scratch']
  %s0 = inlined_call_operand.vmem [shape: bf16[512,36], index: 0, kind: input, shape index: {}]
  %s1 = inlined_call_operand.vmem [shape: bf16[36,128], index: 1, kind: input, shape index: {}]
  %s2 = inlined_call_operand.hbm [shape: f32[4,1,128], index: 2, kind: output, shape index: {0}]
  %s3 = inlined_call_operand.hbm [shape: f32[4,1,128], index: 3, kind: output, shape index: {1}]
  %s4 = inlined_call_operand.vmem [shape: f32[512,8], index: 4, kind: output, shape index: {2}]
  %5 = xla_tuple %s2, %s3, %s4
  %s6 = sld [smem:[#allocation0]]
  $region57: #{tpu_custom_call.1} parent=0
    _
  %s8 = ssub.s32 1, %s6
  %s9 = scalar_select 0, %s8, %s6
  $region1: #{tpu_custom_call.1} parent=0
    #allocation2 [shape = 'u8[1024]{0}', space=vmem, size = 0x400, scoped, tag = 'output window, operand 0']
    #allocation3 [shape = 's32[2]{0}', space=sflag, size = 0x8, scoped, tag = 'scoped memory for tpu_custom_call.1']
    #allocation4 [shape = 'u8[1024]{0}', space=vmem, size = 0x400, scoped, tag = 'output window, operand 1']
    #allocation5 [shape = 's32[2]{0}', space=sflag, size = 0x8, scoped, tag = 'scoped memory for tpu_custom_call.1']
    %10 = vsyncpa [#allocation3], 0
    %s11 = scalar_lea.sflag [#allocation3], 1
    %12 = vsyncpa %s11, 0
    %13 = vsyncpa [#allocation5], 0
    %s14 = scalar_lea.sflag [#allocation5], 1
    %15 = vsyncpa %s14, 0
    loop: start=0, step=1, limit=6
    $region2: #{tpu_custom_call.1} parent=1 // loop_pre_header
      _
    $region3: #{tpu_custom_call.1} parent=1 // loop_header
      %s17 = sphi 0, %s21
      %p18 = scmp.ge.s32.totalorder %s17, 6
      %s27 = sphi 0, %s29
      %s30 = sphi 0, %s27
      %s31 = sphi 0, %s30
      %s47 = sphi 0, %s31
      %s51 = sphi 0, %s51
      %s53 = sphi 0, %s51
      %s54 = sphi 0, %s53
      %s68 = sphi 0, %s54
      %s74 = sphi 0, %s76
      %s77 = sphi 0, %s74
      %s78 = sphi 0, %s77
      %s94 = sphi 0, %s78
      %s100 = sphi 0, %s102
      %s103 = sphi 0, %s100
      %s104 = sphi 0, %s103
      %s120 = sphi 0, %s104
      %s126 = sphi 0, %s128
      %s129 = sphi 0, %s126
      %s130 = sphi 0, %s129
      %s146 = sphi 0, %s130
    $region4: #{tpu_custom_call.1} parent=1 // loop_header_branch
      %20 = sbr.rel (%p18) target = $region8
    $region5: #{tpu_custom_call.1} parent=1 // loop_body
      %s22 = ssub.s32 %s17, 1
      %s23 = ssub.s32 %s17, 2
      %s24 = sadd.s32 %s17, 1
      %s25 = ssub.s32 %s17, %s24
      %p26 = scmp.eq.s32.totalorder %s25, 0
      %s28 = sadd.s32 %s27, 1
      %s29 = scalar_select %p26, %s27, %s28
      %p32 = pneg %p26
      %p33 = scmp.eq.s32.totalorder %s17, 3
      %p34 = por %p32, %p33
      %p35 = scmp.ne.s32.totalorder %s27, %s30
      %p36 = scmp.eq.s32.totalorder %s17, 0
      %p37 = por %p35, %p36
      %p38 = scmp.ne.s32.totalorder %s27, %s30
      %p39 = scmp.eq.s32.totalorder %s22, 3
      %p40 = por %p38, %p39
      %p41 = scmp.ne.s32.totalorder %s30, %s31
      %p42 = scmp.eq.s32.totalorder %s22, 0
      %p43 = por %p41, %p42
      %p44 = scmp.ne.s32.totalorder %s30, %s31
      %p45 = scmp.eq.s32.totalorder %s23, 3
      %p46 = por %p44, %p45
      %p48 = scmp.ne.s32.totalorder %s31, %s47
      %p49 = scmp.eq.s32.totalorder %s23, 0
      %p50 = por %p48, %p49
      %s52 = sadd.s32 %s51, 1
      %p55 = scmp.eq.s32.totalorder %s17, 3
      %p56 = scmp.ne.s32.totalorder %s51, %s53
      %p57 = scmp.eq.s32.totalorder %s17, 0
      %p58 = por %p56, %p57
      %p59 = scmp.ne.s32.totalorder %s51, %s53
      %p60 = scmp.eq.s32.totalorder %s22, 3
      %p61 = por %p59, %p60
      %p62 = scmp.ne.s32.totalorder %s53, %s54
      %p63 = scmp.eq.s32.totalorder %s22, 0
      %p64 = por %p62, %p63
      %p65 = scmp.ne.s32.totalorder %s53, %s54
      %p66 = scmp.eq.s32.totalorder %s23, 3
      %p67 = por %p65, %p66
      %p69 = scmp.ne.s32.totalorder %s54, %s68
      %p70 = scmp.eq.s32.totalorder %s23, 0
      %p71 = por %p69, %p70
      %s72 = ssub.s32 %s17, %s24
      %p73 = scmp.eq.s32.totalorder %s72, 0
      %s75 = sadd.s32 %s74, 1
      %s76 = scalar_select %p73, %s74, %s75
      %p79 = pneg %p73
      %p80 = scmp.eq.s32.totalorder %s17, 3
      %p81 = por %p79, %p80
      %p82 = scmp.ne.s32.totalorder %s74, %s77
      %p83 = scmp.eq.s32.totalorder %s17, 0
      %p84 = por %p82, %p83
      %p85 = scmp.ne.s32.totalorder %s74, %s77
      %p86 = scmp.eq.s32.totalorder %s22, 3
      %p87 = por %p85, %p86
      %p88 = scmp.ne.s32.totalorder %s77, %s78
      %p89 = scmp.eq.s32.totalorder %s22, 0
      %p90 = por %p88, %p89
      %p91 = scmp.ne.s32.totalorder %s77, %s78
      %p92 = scmp.eq.s32.totalorder %s23, 3
      %p93 = por %p91, %p92
      %p95 = scmp.ne.s32.totalorder %s78, %s94
      %p96 = scmp.eq.s32.totalorder %s23, 0
      %p97 = por %p95, %p96
      %s98 = ssub.s32 %s17, %s24
      %p99 = scmp.eq.s32.totalorder %s98, 0
      %s101 = sadd.s32 %s100, 1
      %s102 = scalar_select %p99, %s100, %s101
      %p105 = pneg %p99
      %p106 = scmp.eq.s32.totalorder %s17, 3
      %p107 = por %p105, %p106
      %p108 = scmp.ne.s32.totalorder %s100, %s103
      %p109 = scmp.eq.s32.totalorder %s17, 0
      %p110 = por %p108, %p109
      %p111 = scmp.ne.s32.totalorder %s100, %s103
      %p112 = scmp.eq.s32.totalorder %s22, 3
      %p113 = por %p111, %p112
      %p114 = scmp.ne.s32.totalorder %s103, %s104
      %p115 = scmp.eq.s32.totalorder %s22, 0
      %p116 = por %p114, %p115
      %p117 = scmp.ne.s32.totalorder %s103, %s104
      %p118 = scmp.eq.s32.totalorder %s23, 3
      %p119 = por %p117, %p118
      %p121 = scmp.ne.s32.totalorder %s104, %s120
      %p122 = scmp.eq.s32.totalorder %s23, 0
      %p123 = por %p121, %p122
      %s124 = ssub.s32 %s17, %s24
      %p125 = scmp.eq.s32.totalorder %s124, 0
      %s127 = sadd.s32 %s126, 1
      %s128 = scalar_select %p125, %s126, %s127
      %p131 = pneg %p125
      %p132 = scmp.eq.s32.totalorder %s17, 3
      %p133 = por %p131, %p132
      %p134 = scmp.ne.s32.totalorder %s126, %s129
      %p135 = scmp.eq.s32.totalorder %s17, 0
      %p136 = por %p134, %p135
      %p137 = scmp.ne.s32.totalorder %s126, %s129
      %p138 = scmp.eq.s32.totalorder %s22, 3
      %p139 = por %p137, %p138
      %p140 = scmp.ne.s32.totalorder %s129, %s130
      %p141 = scmp.eq.s32.totalorder %s22, 0
      %p142 = por %p140, %p141
      %p143 = scmp.ne.s32.totalorder %s129, %s130
      %p144 = scmp.eq.s32.totalorder %s23, 3
      %p145 = por %p143, %p144
      %p147 = scmp.ne.s32.totalorder %s130, %s146
      %p148 = scmp.eq.s32.totalorder %s23, 0
      %p149 = por %p147, %p148
      %p150 = scmp.le.s32.totalorder 1, %s17
      %p151 = scmp.lt.s32.totalorder %s17, 5
      %p152 = pnand %p150, %p151
      %p153 = pneg %p152
      // Predicated region
      $region9: #{tpu_custom_call.1} parent=5 // pred_check
        _
      $region10: #{tpu_custom_call.1} parent=5 // pred_check_branch
        %155 = sbr.rel (%p152) target = $region12
      $region11: #{tpu_custom_call.1} parent=5 // pred_region
        %s156 = ssub.s32 %s17, 1
        // Predicated region
        $region13: #{tpu_custom_call.1} parent=11 // pred_check
          %p157 = pneg %p64
        $region14: #{tpu_custom_call.1} parent=11 // pred_check_branch
          %159 = sbr.rel (%p157) target = $region16
        $region15: #{tpu_custom_call.1} parent=11 // pred_region
          _
        $region16: #{tpu_custom_call.1} parent=11 // pred_fallthru
          _
      $region12: #{tpu_custom_call.1} parent=5 // pred_fallthru
        _
      %p160 = scmp.lt.s32.totalorder %s17, 4
      // Predicated region
      $region17: #{tpu_custom_call.1} parent=5 // pred_check
        %p161 = pneg %p160
      $region18: #{tpu_custom_call.1} parent=5 // pred_check_branch
        %163 = sbr.rel (%p161) target = $region20
      $region19: #{tpu_custom_call.1} parent=5 // pred_region
        // Predicated region
        $region21: #{tpu_custom_call.1} parent=19 // pred_check
          %p164 = pneg %p37
        $region22: #{tpu_custom_call.1} parent=19 // pred_check_branch
          %166 = sbr.rel (%p164) target = $region24
        $region23: #{tpu_custom_call.1} parent=19 // pred_region
          %s167 = smul.u32 16, %s17
          %p168 = scmp.lt.s32.totalorder %s167, 63
          %s169 = scalar_select %p168, %s167, 63
          %s170 = smul.addr %s169, 4
          %s171 = scalar_lea.vmem %s0, %s170
          %s172 = smul.u32 16, %s17
        $region24: #{tpu_custom_call.1} parent=19 // pred_fallthru
          _
      $region20: #{tpu_custom_call.1} parent=5 // pred_fallthru
        _
      %p173 = scmp.le.s32.totalorder 1, %s17
      %p174 = scmp.lt.s32.totalorder %s17, 5
      %p175 = pnand %p173, %p174
      %p176 = pneg %p175
      // Predicated region
      $region25: #{tpu_custom_call.1} parent=5 // pred_check
        _
      $region26: #{tpu_custom_call.1} parent=5 // pred_check_branch
        %178 = sbr.rel (%p175) target = $region28
      $region27: #{tpu_custom_call.1} parent=5 // pred_region
        %s179 = ssub.s32 %s17, 1
        %s180 = smul.u32 16, %s22
        %p181 = scmp.lt.s32.totalorder %s180, 63
        %s182 = scalar_select %p181, %s180, 63
        %s183 = smul.addr %s182, 4
        %s184 = scalar_lea.vmem %s0, %s183
        %p185 = pneg %p43
        %p186 = pneg %p40
        %p187 = pneg %p64
        %p188 = pneg %p61
        %p189 = pneg %p90
        %p190 = pneg %p87
        %s191 = sand.u32 %s77, 1
        %s192 = scalar_lea.sflag [#allocation3], %s191
        %s193 = sand.u32 %s77, 1
        %s194 = scalar_lea.vmem [#allocation2], %s193
        %p195 = pneg %p116
        %p196 = pneg %p113
        %s197 = sand.u32 %s103, 1
        %s198 = scalar_lea.sflag [#allocation5], %s197
        %s199 = sand.u32 %s103, 1
        %s200 = scalar_lea.vmem [#allocation4], %s199
        %p201 = pneg %p142
        %p202 = pneg %p139
        %s203 = smul.u32 16, %s22
        %p204 = scmp.lt.s32.totalorder %s203, 63
        %s205 = scalar_select %p204, %s203, 63
        %s206 = smul.addr %s205, 8
        %s207 = scalar_lea.vmem %s4, %s206
        %s208 = smul.u32 16, %s22
        %p209 = scmp.lt.s32.totalorder %s208, 63
        %s210 = scalar_select %p209, %s208, 63
        %s211 = smul.addr %s210, 4
        %s212 = scalar_lea.vmem %s0, %s211
        %s213 = smul.u32 16, %s22
        %s214 = smul.u32 16, %s22
        %p215 = scmp.lt.s32.totalorder %s214, 63
        %s216 = scalar_select %p215, %s214, 63
        %s217 = smul.addr %s216, 8
        %s218 = scalar_lea.vmem %s4, %s217
        %s219 = smul.u32 16, %s22
        %v221 = vld [vmem:[%s212] sm:$0xf]
        %v222 = vld [vmem:[%s212 + $0x4] sm:$0xf]
        %v223 = vld [vmem:[%s212 + $0x8] sm:$0xf]
        %v224 = vld [vmem:[%s212 + $0xc] sm:$0xf]
        %v225 = vld [vmem:[%s212 + $0x10] sm:$0xf]
        %v226 = vld [vmem:[%s212 + $0x14] sm:$0xf]
        %v227 = vld [vmem:[%s212 + $0x18] sm:$0xf]
        %v228 = vld [vmem:[%s212 + $0x1c] sm:$0xf]
        %v229 = vld [vmem:[%s212 + $0x20] sm:$0xf]
        %v230 = vld [vmem:[%s212 + $0x24] sm:$0xf]
        %v231 = vld [vmem:[%s212 + $0x28] sm:$0xf]
        %v232 = vld [vmem:[%s212 + $0x2c] sm:$0xf]
        %v233 = vld [vmem:[%s212 + $0x30] sm:$0xf]
        %v234 = vld [vmem:[%s212 + $0x34] sm:$0xf]
        %v235 = vld [vmem:[%s212 + $0x38] sm:$0xf]
        %v236 = vld [vmem:[%s212 + $0x3c] sm:$0xf]
        %v237 = vld [vmem:[%s1] sm:$0xf]
        %v238 = vld [vmem:[%s1 + $0x4] sm:$0xf]
        %v239 = vld [vmem:[%s1 + $0x8] sm:$0xf]
        %v240 = vld [vmem:[%s1 + $0xc] sm:$0xf]
        %v241 = vld [vmem:[%s1 + $0x10] sm:$0x3]
        %v258 = vunpack.c.l.b16 %v221
        %v259 = vunpack.c.l.b16 %v222
        %v260 = vunpack.c.l.b16 %v223
        %v261 = vunpack.c.l.b16 %v224
        %v262 = vunpack.c.l.b16 %v225
        %v263 = vunpack.c.l.b16 %v226
        %v264 = vunpack.c.l.b16 %v227
        %v265 = vunpack.c.l.b16 %v228
        %v266 = vunpack.c.l.b16 %v229
        %v267 = vunpack.c.l.b16 %v230
        %v268 = vunpack.c.l.b16 %v231
        %v269 = vunpack.c.l.b16 %v232
        %v270 = vunpack.c.l.b16 %v233
        %v271 = vunpack.c.l.b16 %v234
        %v272 = vunpack.c.l.b16 %v235
        %v273 = vunpack.c.l.b16 %v236
        %v274 = vpack.c.b16 %v259, %v258
        %v275 = vpack.c.b16 %v261, %v260
        %v276 = vpack.c.b16 %v263, %v262
        %v277 = vpack.c.b16 %v265, %v264
        %v278 = vpack.c.b16 %v267, %v266
        %v279 = vpack.c.b16 %v269, %v268
        %v280 = vpack.c.b16 %v271, %v270
        %v281 = vpack.c.b16 %v273, %v272
        %v287 = vunpack.c.l.b16 %v237
        %v288 = vunpack.c.l.b16 %v238
        %v289 = vunpack.c.l.b16 %v239
        %v290 = vunpack.c.l.b16 %v240
        %v291 = vunpack.c.l.b16 %v241
        %v292 = vpack.c.b16 %v288, %v287
        %v293 = vpack.c.b16 %v290, %v289
        %v294 = vpack.c.b16 %v291, %v291
        %vm297 = vcmask 293888
        %v299 = vsel %vm297, %v274, 0
        %v302 = vsel %vm297, %v275, 0
        %v305 = vsel %vm297, %v276, 0
        %v308 = vsel %vm297, %v277, 0
        %v311 = vsel %vm297, %v278, 0
        %v314 = vsel %vm297, %v279, 0
        %v317 = vsel %vm297, %v280, 0
        %v320 = vsel %vm297, %v281, 0
        %vm322 = vcmask 1041408
        %v324 = vsel %vm322, %v294, 0
        %326 = vmatprep.subr.bf16.mxu0 0
        %327 = vmatpush1.bf16.msra.mxu0 %v292
        %328 = vmatprep.subr.bf16.mxu0 0
        %329 = vmatpush1.bf16.msra.mxu0 %v293
        %330 = vmatprep.subr.bf16.mxu0 0
        %331 = vmatpush1.bf16.msra.mxu0 %v324
        %332 = vmatprep.subr.bf16.mxu0 0
        %333 = vmatpush1.bf16.msra.mxu0 0
        %334 = vmatprep.subr.bf16.mxu0 0
        %335 = vmatpush1.bf16.msra.mxu0 0
        %336 = vmatprep.subr.bf16.mxu0 0
        %337 = vmatpush1.bf16.msra.mxu0 0
        %338 = vmatprep.subr.bf16.mxu0 0
        %339 = vmatpush1.bf16.msra.mxu0 0
        %340 = vmatprep.subr.bf16.mxu0 0
        %341 = vmatpush1.bf16.msra.mxu0 0
        %342 = vmatprep.subr.bf16.mxu0 0
        %343 = vmatpush1.bf16.msra.mxu0 0
        %344 = vmatprep.subr.bf16.mxu0 0
        %345 = vmatpush1.bf16.msra.mxu0 0
        %346 = vmatprep.subr.bf16.mxu0 0
        %347 = vmatpush1.bf16.msra.mxu0 0
        %348 = vmatprep.subr.bf16.mxu0 0
        %349 = vmatpush1.bf16.msra.mxu0 0
        %350 = vmatprep.subr.bf16.mxu0 0
        %351 = vmatpush1.bf16.msra.mxu0 0
        %352 = vmatprep.subr.bf16.mxu0 0
        %353 = vmatpush1.bf16.msra.mxu0 0
        %354 = vmatprep.subr.bf16.mxu0 0
        %355 = vmatpush1.bf16.msra.mxu0 0
        %356 = vmatprep.subr.bf16.mxu0 0
        %357 = vmatpush1.bf16.msra.mxu0 0
        %358 = vmatprep.mubr.bf16.mxu0 0
        %359 = vmatmul.mubr.bf16.gmra.mrb[0].mxu0 %v299
        %v360 = vpop.f32.mrb[0].mxu0
        %v361 = vadd.f32 0.0, %v360
        %v362 = vpop.f32.mrb[0].mxu0
        %v363 = vpop.f32.mrb[0].mxu0
        %v364 = vadd.f32 0.0, %v363
        %v365 = vpop.f32.mrb[0].mxu0
        %366 = vmatprep.mubr.bf16.mxu0 0
        %367 = vmatmul.mubr.bf16.gmra.mrb[0].mxu0 %v302
        %v368 = vpop.f32.mrb[0].mxu0
        %v369 = vadd.f32 0.0, %v368
        %v370 = vpop.f32.mrb[0].mxu0
        %v371 = vpop.f32.mrb[0].mxu0
        %v372 = vadd.f32 0.0, %v371
        %v373 = vpop.f32.mrb[0].mxu0
        %374 = vmatprep.mubr.bf16.mxu0 0
        %375 = vmatmul.mubr.bf16.gmra.mrb[0].mxu0 %v305
        %v376 = vpop.f32.mrb[0].mxu0
        %v377 = vadd.f32 0.0, %v376
        %v378 = vpop.f32.mrb[0].mxu0
        %v379 = vpop.f32.mrb[0].mxu0
        %v380 = vadd.f32 0.0, %v379
        %v381 = vpop.f32.mrb[0].mxu0
        %382 = vmatprep.mubr.bf16.mxu0 0
        %383 = vmatmul.mubr.bf16.gmra.mrb[0].mxu0 %v308
        %v384 = vpop.f32.mrb[0].mxu0
        %v385 = vadd.f32 0.0, %v384
        %v386 = vpop.f32.mrb[0].mxu0
        %v387 = vpop.f32.mrb[0].mxu0
        %v388 = vadd.f32 0.0, %v387
        %v389 = vpop.f32.mrb[0].mxu0
        %390 = vmatprep.mubr.bf16.mxu0 0
        %391 = vmatmul.mubr.bf16.gmra.mrb[0].mxu0 %v311
        %v392 = vpop.f32.mrb[0].mxu0
        %v393 = vadd.f32 0.0, %v392
        %v394 = vpop.f32.mrb[0].mxu0
        %v395 = vpop.f32.mrb[0].mxu0
        %v396 = vadd.f32 0.0, %v395
        %v397 = vpop.f32.mrb[0].mxu0
        %398 = vmatprep.mubr.bf16.mxu0 0
        %399 = vmatmul.mubr.bf16.gmra.mrb[0].mxu0 %v314
        %v400 = vpop.f32.mrb[0].mxu0
        %v401 = vadd.f32 0.0, %v400
        %v402 = vpop.f32.mrb[0].mxu0
        %v403 = vpop.f32.mrb[0].mxu0
        %v404 = vadd.f32 0.0, %v403
        %v405 = vpop.f32.mrb[0].mxu0
        %406 = vmatprep.mubr.bf16.mxu0 0
        %407 = vmatmul.mubr.bf16.gmra.mrb[0].mxu0 %v317
        %v408 = vpop.f32.mrb[0].mxu0
        %v409 = vadd.f32 0.0, %v408
        %v410 = vpop.f32.mrb[0].mxu0
        %v411 = vpop.f32.mrb[0].mxu0
        %v412 = vadd.f32 0.0, %v411
        %v413 = vpop.f32.mrb[0].mxu0
        %414 = vmatprep.mubr.bf16.mxu0 0
        %415 = vmatmul.mubr.bf16.gmra.mrb[0].mxu0 %v320
        %v416 = vpop.f32.mrb[0].mxu0
        %v417 = vadd.f32 0.0, %v416
        %v418 = vpop.f32.mrb[0].mxu0
        %v419 = vpop.f32.mrb[0].mxu0
        %v420 = vadd.f32 0.0, %v419
        %v421 = vpop.f32.mrb[0].mxu0
        %422 = vdwg.mxu0
        %v423 = vadd.f32 %v361, %v364
        %v424 = vadd.f32 %v423, %v369
        %v425 = vadd.f32 %v424, %v372
        %v426 = vadd.f32 %v425, %v377
        %v427 = vadd.f32 %v426, %v380
        %v428 = vadd.f32 %v427, %v385
        %v429 = vadd.f32 %v428, %v388
        %v430 = vadd.f32 %v429, %v393
        %v431 = vadd.f32 %v430, %v396
        %v432 = vadd.f32 %v431, %v401
        %v433 = vadd.f32 %v432, %v404
        %v434 = vadd.f32 %v433, %v409
        %v435 = vadd.f32 %v434, %v412
        %v436 = vadd.f32 %v435, %v417
        %v437 = vadd.f32 %v436, %v420
        %v438 = vrot.slane %v437, 4
        %v439 = vadd.f32 %v437, %v438
        %v440 = vrot.slane %v439, 2
        %v441 = vadd.f32 %v439, %v440
        %v442 = vrot.slane %v441, 1
        %v443 = vadd.f32 %v441, %v442
        %444 = vst [vmem:[%s194] sm:$0x1] %v443
        %v445 = vmul.f32 %v361, %v361
        %v446 = vmul.f32 %v364, %v364
        %v447 = vmul.f32 %v369, %v369
        %v448 = vmul.f32 %v372, %v372
        %v449 = vmul.f32 %v377, %v377
        %v450 = vmul.f32 %v380, %v380
        %v451 = vmul.f32 %v385, %v385
        %v452 = vmul.f32 %v388, %v388
        %v453 = vmul.f32 %v393, %v393
        %v454 = vmul.f32 %v396, %v396
        %v455 = vmul.f32 %v401, %v401
        %v456 = vmul.f32 %v404, %v404
        %v457 = vmul.f32 %v409, %v409
        %v458 = vmul.f32 %v412, %v412
        %v459 = vmul.f32 %v417, %v417
        %v460 = vmul.f32 %v420, %v420
        %v461 = vadd.f32 %v445, %v446
        %v462 = vadd.f32 %v461, %v447
        %v463 = vadd.f32 %v462, %v448
        %v464 = vadd.f32 %v463, %v449
        %v465 = vadd.f32 %v464, %v450
        %v466 = vadd.f32 %v465, %v451
        %v467 = vadd.f32 %v466, %v452
        %v468 = vadd.f32 %v467, %v453
        %v469 = vadd.f32 %v468, %v454
        %v470 = vadd.f32 %v469, %v455
        %v471 = vadd.f32 %v470, %v456
        %v472 = vadd.f32 %v471, %v457
        %v473 = vadd.f32 %v472, %v458
        %v474 = vadd.f32 %v473, %v459
        %v475 = vadd.f32 %v474, %v460
        %v476 = vrot.slane %v475, 4
        %v477 = vadd.f32 %v475, %v476
        %v478 = vrot.slane %v477, 2
        %v479 = vadd.f32 %v477, %v478
        %v480 = vrot.slane %v479, 1
        %v481 = vadd.f32 %v479, %v480
        %482 = vst [vmem:[%s200] sm:$0x1] %v481
        %vm483 = vcmask 64512
        %484 = vst.msk [vmem:[%s218] sm:$0xff] %vm483, %v361
        %485 = vst.msk [vmem:[%s218 + $0x8] sm:$0xff] %vm483, %v364
        %486 = vst.msk [vmem:[%s218 + $0x10] sm:$0xff] %vm483, %v369
        %487 = vst.msk [vmem:[%s218 + $0x18] sm:$0xff] %vm483, %v372
        %488 = vst.msk [vmem:[%s218 + $0x20] sm:$0xff] %vm483, %v377
        %489 = vst.msk [vmem:[%s218 + $0x28] sm:$0xff] %vm483, %v380
        %490 = vst.msk [vmem:[%s218 + $0x30] sm:$0xff] %vm483, %v385
        %491 = vst.msk [vmem:[%s218 + $0x38] sm:$0xff] %vm483, %v388
        %492 = vst.msk [vmem:[%s218 + $0x40] sm:$0xff] %vm483, %v393
        %493 = vst.msk [vmem:[%s218 + $0x48] sm:$0xff] %vm483, %v396
        %494 = vst.msk [vmem:[%s218 + $0x50] sm:$0xff] %vm483, %v401
        %495 = vst.msk [vmem:[%s218 + $0x58] sm:$0xff] %vm483, %v404
        %496 = vst.msk [vmem:[%s218 + $0x60] sm:$0xff] %vm483, %v409
        %497 = vst.msk [vmem:[%s218 + $0x68] sm:$0xff] %vm483, %v412
        %498 = vst.msk [vmem:[%s218 + $0x70] sm:$0xff] %vm483, %v417
        %499 = vst.msk [vmem:[%s218 + $0x78] sm:$0xff] %vm483, %v420
        %s500 = sand.u32 %s77, 1
        %s501 = scalar_lea.sflag [#allocation3], %s500
        %s502 = sand.u32 %s77, 1
        %s503 = scalar_lea.vmem [#allocation2], %s502
        %s504 = sand.u32 %s103, 1
        %s505 = scalar_lea.sflag [#allocation5], %s504
        %s506 = sand.u32 %s103, 1
        %s507 = scalar_lea.vmem [#allocation4], %s506
        %s508 = smul.u32 16, %s22
        %p509 = scmp.lt.s32.totalorder %s508, 63
        %s510 = scalar_select %p509, %s508, 63
        %s511 = smul.addr %s510, 8
        %s512 = scalar_lea.vmem %s4, %s511
        // Predicated region
        $region29: #{tpu_custom_call.1} parent=27 // pred_check
          %p513 = pneg %p87
        $region30: #{tpu_custom_call.1} parent=27 // pred_check_branch
          %515 = sbr.rel (%p513) target = $region32
        $region31: #{tpu_custom_call.1} parent=27 // pred_region
          %s517 = ssub.s32 16, 16
          %518 = vsyncadd %s501, %s517
          %s519 = smul.addr %s22, 16
          %s520 = scalar_lea.hbm %s2, %s519
          %s522 = sshll.u32 %s503, 4
          %s523 = int_to_ptr.vmem [resolvable:$true] %s522
          %525 = dma.vmem_to_hbm [thread:$0]  %s523, 16, %s520, %s501
        $region32: #{tpu_custom_call.1} parent=27 // pred_fallthru
          _
        // Predicated region
        $region33: #{tpu_custom_call.1} parent=27 // pred_check
          %p526 = pneg %p113
        $region34: #{tpu_custom_call.1} parent=27 // pred_check_branch
          %528 = sbr.rel (%p526) target = $region36
        $region35: #{tpu_custom_call.1} parent=27 // pred_region
          %s530 = ssub.s32 16, 16
          %531 = vsyncadd %s505, %s530
          %s532 = smul.addr %s22, 16
          %s533 = scalar_lea.hbm %s3, %s532
          %s535 = sshll.u32 %s507, 4
          %s536 = int_to_ptr.vmem [resolvable:$true] %s535
          %538 = dma.vmem_to_hbm [thread:$0]  %s536, 16, %s533, %s505
        $region36: #{tpu_custom_call.1} parent=27 // pred_fallthru
          _
        // Predicated region
        $region37: #{tpu_custom_call.1} parent=27 // pred_check
          %p539 = pneg %p139
        $region38: #{tpu_custom_call.1} parent=27 // pred_check_branch
          %541 = sbr.rel (%p539) target = $region40
        $region39: #{tpu_custom_call.1} parent=27 // pred_region
          %s542 = smul.u32 16, %s22
        $region40: #{tpu_custom_call.1} parent=27 // pred_fallthru
          _
      $region28: #{tpu_custom_call.1} parent=5 // pred_fallthru
        _
      %p543 = scmp.le.s32.totalorder 2, %s17
      // Predicated region
      $region41: #{tpu_custom_call.1} parent=5 // pred_check
        %p544 = pneg %p543
      $region42: #{tpu_custom_call.1} parent=5 // pred_check_branch
        %546 = sbr.rel (%p544) target = $region44
      $region43: #{tpu_custom_call.1} parent=5 // pred_region
        %s547 = ssub.s32 %s17, 2
        // Predicated region
        $region45: #{tpu_custom_call.1} parent=43 // pred_check
          %p548 = pneg %p93
        $region46: #{tpu_custom_call.1} parent=43 // pred_check_branch
          %550 = sbr.rel (%p548) target = $region48
        $region47: #{tpu_custom_call.1} parent=43 // pred_region
          %s551 = sand.u32 %s78, 1
          %s552 = scalar_lea.sflag [#allocation3], %s551
          %s553 = sand.u32 %s78, 1
          %s554 = scalar_lea.vmem [#allocation2], %s553
          %555 = dma.done %s552, 16
        $region48: #{tpu_custom_call.1} parent=43 // pred_fallthru
          _
        // Predicated region
        $region49: #{tpu_custom_call.1} parent=43 // pred_check
          %p556 = pneg %p119
        $region50: #{tpu_custom_call.1} parent=43 // pred_check_branch
          %558 = sbr.rel (%p556) target = $region52
        $region51: #{tpu_custom_call.1} parent=43 // pred_region
          %s559 = sand.u32 %s104, 1
          %s560 = scalar_lea.sflag [#allocation5], %s559
          %s561 = sand.u32 %s104, 1
          %s562 = scalar_lea.vmem [#allocation4], %s561
          %563 = dma.done %s560, 16
        $region52: #{tpu_custom_call.1} parent=43 // pred_fallthru
          _
        // Predicated region
        $region53: #{tpu_custom_call.1} parent=43 // pred_check
          %p564 = pneg %p145
        $region54: #{tpu_custom_call.1} parent=43 // pred_check_branch
          %566 = sbr.rel (%p564) target = $region56
        $region55: #{tpu_custom_call.1} parent=43 // pred_region
          %s567 = smul.u32 16, %s23
          %p568 = scmp.lt.s32.totalorder %s567, 63
          %s569 = scalar_select %p568, %s567, 63
          %s570 = smul.addr %s569, 8
          %s571 = scalar_lea.vmem %s4, %s570
        $region56: #{tpu_custom_call.1} parent=43 // pred_fallthru
          _
      $region44: #{tpu_custom_call.1} parent=5 // pred_fallthru
        _
    $region6: #{tpu_custom_call.1} parent=1 // loop_footer
      %s21 = sadd.s32 1, %s17
    $region7: #{tpu_custom_call.1} parent=1 // loop_footer_branch
      %16 = sbr.rel target = $region3
    $region8: #{tpu_custom_call.1} parent=1 // loop_exit
      _
    %572 = vsyncpa [#allocation3], 1
    %s573 = scalar_lea.sflag [#allocation3], 1
    %574 = vsyncpa %s573, 1
    %575 = vsyncpa [#allocation5], 1
    %s576 = scalar_lea.sflag [#allocation5], 1
    %577 = vsyncpa %s576, 1

</llo_original>
